<compile_context>
chip_gen: v6e
topology: v6e:2x2x1
jax: 0.10.0
libtpu: 0.0.40
codegen_flags: <defaults>
</compile_context>

<pallas_src>
import string
import unicodedata

import jax
import jax.numpy as jnp
from jax.experimental import pallas as pl
from jax.experimental.pallas import tpu as pltpu

# ----------------------------------------------------------------------------
# Host-side string encoding (exact replica of the PyTorch helpers' semantics)
# ----------------------------------------------------------------------------
PAD_CODE = 0
UNK_CODE = 1
all_letters = string.ascii_letters + " .,;'-"
VOCAB_SIZE = len(all_letters) + 2  # 60


def _letter_to_int(inp: str, index: int) -> int:
    if index >= len(inp):
        return PAD_CODE
    ix = all_letters.find(inp[index])
    return ix + 2 if ix != -1 else UNK_CODE


def _unicode_to_ascii(s: str) -> str:
    return "".join(
        c
        for c in unicodedata.normalize("NFD", s)
        if unicodedata.category(c) != "Mn" and c in all_letters
    )


def _encode_str(inp: str, pad: int) -> list:
    inp = _unicode_to_ascii(inp)
    return [_letter_to_int(inp, i) for i in range(pad)]


def encode_strings(strings, pad: int) -> jnp.ndarray:
    # Equivalent of torch.stack([_encode_str(x) for x in strings])
    return jnp.asarray([_encode_str(s, pad) for s in strings], dtype=jnp.int32)


def _round_up(x: int, m: int) -> int:
    return ((x + m - 1) // m) * m


# ----------------------------------------------------------------------------
# Pallas kernel: embedding lookup as a transposed one-hot matmul
# ----------------------------------------------------------------------------
def _embedding_kernel(idx_ref, table_t_ref, out_ref):
    # idx_ref:     (1, TILE_N)      int32   -- character codes (tokens on lanes)
    # table_t_ref: (Epad, Vpad)     float32 -- transposed embedding table (resident)
    # out_ref:     (Epad, TILE_N)   float32 -- transposed embeddings (lane-dense)
    vpad = table_t_ref.shape[1]
    tile_n = out_ref.shape[1]

    idx = idx_ref[...]                                               # (1, TILE_N)
    vocab_iota = jax.lax.broadcasted_iota(jnp.int32, (vpad, tile_n), 0)
    # One-hot along the (sublane) vocab axis; padded vocab rows are never hit.
    # Host-side encoder guarantees codes in [0, VOCAB_SIZE); an out-of-range
    # code would select nothing and produce an all-zero column.
    one_hot_t = (vocab_iota == idx).astype(jnp.float32)              # (Vpad, TILE_N)

    out_ref[...] = jnp.dot(
        table_t_ref[...],
        one_hot_t,
        preferred_element_type=jnp.float32,
        precision=jax.lax.Precision.HIGHEST,   # exact gather of f32 table values
    )


def character_encoder_forward(
    indices: jnp.ndarray, table: jnp.ndarray, *, tile_n: int = 512
) -> jnp.ndarray:
    """indices: [B, pad] int, table: [V, E] float32 -> [B, pad, E] float32."""
    B, P = indices.shape
    V, E = table.shape
    N = B * P

    # Lane-dense tiling of the token axis: TILE_N a multiple of 128.
    tile_n = max(128, (tile_n // 128) * 128)
    tile_n = min(tile_n, _round_up(N, 128))
    n_pad = _round_up(N, tile_n)

    # Sublane-align vocab (matmul K) and embedding (output sublane) dims.
    v_pad = _round_up(V, 8)   # 60 -> 64
    e_pad = _round_up(E, 8)
    table_t = (
        jnp.zeros((e_pad, v_pad), jnp.float32)
        .at[:E, :V]
        .set(table.astype(jnp.float32).T)
    )

    # Flatten indices into a single lane-major row; pad tail with PAD_CODE
    # (the padded tail of the output is sliced off below).
    idx_row = jnp.full((1, n_pad), PAD_CODE, dtype=jnp.int32)
    idx_row = idx_row.at[0, :N].set(indices.reshape(N).astype(jnp.int32))

    grid = (n_pad // tile_n,)
    out_t = pl.pallas_call(
        _embedding_kernel,
        out_shape=jax.ShapeDtypeStruct((e_pad, n_pad), jnp.float32),
        grid=grid,
        in_specs=[
            pl.BlockSpec((1, tile_n), lambda i: (0, i)),      # new index tile per step
            pl.BlockSpec((e_pad, v_pad), lambda i: (0, 0)),   # table stays resident
        ],
        out_specs=pl.BlockSpec((e_pad, tile_n), lambda i: (0, i)),
        compiler_params=pltpu.CompilerParams(
            dimension_semantics=("parallel",),  # shard tiles across v7x TCs
        ),
    )(idx_row, table_t)

    # Kernel emits lane-dense [E, N]; restore the module's [B, pad, E] layout.
    return out_t[:E, :N].T.reshape(B, P, E)


# ----------------------------------------------------------------------------
# Demo / correctness check
# ----------------------------------------------------------------------------
if __name__ == "__main__":
    PAD = 8          # module's `pad` argument
    ENC_SIZE = 32    # module's `encoding_size` argument

    base_names = ["Alice", "Bob", "O'Neil", "van der Berg"]
    batch_strings = base_names * 12          # 48 strings -> N = 384 tokens

    # Deterministic parameter init (nn.Embedding.weight ~ N(0, 1)).
    key = jax.random.PRNGKey(0)
    emb_table = jax.random.normal(key, (VOCAB_SIZE, ENC_SIZE), dtype=jnp.float32)

    # Host-side string -> index encoding (pure Python glue, no Pallas equivalent).
    indices = encode_strings(batch_strings, PAD)          # [48, 8] int32

    # Pallas-kernel embedding lookup; small tile to exercise multi-step grid.
    out = character_encoder_forward(indices, emb_table, tile_n=128)
    out = jax.block_until_ready(out)

    # Verify against a plain-JAX reference gather.
    ref = jnp.take(emb_table, indices, axis=0)            # [48, 8, 32]
    assert out.shape == (len(batch_strings), PAD, ENC_SIZE)
    assert jnp.allclose(out, ref, atol=1e-5), "mismatch vs reference gather"

    print("KERNEL_OK")
</pallas_src>

<mosaic_0001>
module attributes {stable_mosaic.version = 11 : i64} {
  func.func @_embedding_kernel(%arg0: i32, %arg1: memref<1x128xi32, #tpu.memory_space<vmem>>, %arg2: memref<32x64xf32, #tpu.memory_space<vmem>>, %arg3: memref<32x128xf32, #tpu.memory_space<vmem>>) attributes {dimension_semantics = [#tpu.dimension_semantics<parallel>], iteration_bounds = array<i64: 3>, scalar_prefetch = 0 : i64, scratch_operands = 0 : i64, tpu.core_type = #tpu.core_type<tc>, window_params = [{transform_indices = @transform_0, window_bounds = array<i64: 1, 128>}, {pipeline_mode = #tpu.pipeline_mode<synchronous>, transform_indices = @transform_1, window_bounds = array<i64: 32, 64>}, {transform_indices = @transform_2, window_bounds = array<i64: 32, 128>}]} {
    %c0 = arith.constant 0 : index
    %c0_0 = arith.constant 0 : index
    %0 = vector.load %arg1[%c0, %c0_0] : memref<1x128xi32, #tpu.memory_space<vmem>>, vector<1x128xi32>
    %1 = tpu.iota {dimensions = array<i32: 0>} : vector<64x128xi32>
    %2 = vector.broadcast %0 : vector<1x128xi32> to vector<64x128xi32>
    %3 = arith.cmpi eq, %1, %2 : vector<64x128xi32>
    %4 = arith.extui %3 : vector<64x128xi1> to vector<64x128xi32>
    %5 = arith.sitofp %4 : vector<64x128xi32> to vector<64x128xf32>
    %c0_1 = arith.constant 0 : index
    %c0_2 = arith.constant 0 : index
    %6 = vector.load %arg2[%c0_1, %c0_2] : memref<32x64xf32, #tpu.memory_space<vmem>>, vector<32x64xf32>
    %cst = arith.constant dense<0.000000e+00> : vector<32x128xf32>
    %7 = tpu.matmul %6, %5, %cst {dimension_numbers = #tpu.dot_dimension_numbers<[1], [0], [0], [1], [0, 0, 1, 1], [], []>, precision = #tpu.contract_precision<fp32>} : vector<32x64xf32>, vector<64x128xf32>, vector<32x128xf32> -> vector<32x128xf32>
    %c0_3 = arith.constant 0 : index
    %c0_4 = arith.constant 0 : index
    %8 = vector.load %arg3[%c0_3, %c0_4] : memref<32x128xf32, #tpu.memory_space<vmem>>, vector<32x128xf32>
    tpu.vector_store %arg3[%c0_3, %c0_4], %7 {strides = array<i32>} : memref<32x128xf32, #tpu.memory_space<vmem>>, vector<32x128xf32>,
    return
  }
  func.func @transform_0(%arg0: i32) -> (i32, i32) {
    %c0_i32 = arith.constant 0 : i32
    %c0_i32_0 = arith.constant 0 : i32
    return %c0_i32, %arg0 : i32, i32
  }
  func.func @transform_1(%arg0: i32) -> (i32, i32) {
    %c0_i32 = arith.constant 0 : i32
    %c0_i32_0 = arith.constant 0 : i32
    %c0_i32_1 = arith.constant 0 : i32
    return %c0_i32, %c0_i32_0 : i32, i32
  }
  func.func @transform_2(%arg0: i32) -> (i32, i32) {
    %c0_i32 = arith.constant 0 : i32
    %c0_i32_0 = arith.constant 0 : i32
    return %c0_i32, %arg0 : i32, i32
  }
}

</mosaic_0001>

<llo_original>
// kernel: tpu_custom_call.1
$region0: #{tpu_custom_call.1}
  #allocation0 [shape = 'u32[]', space=smem, size = 0x4, offset = 0x4, fixed_abs, tag = 'smem constant byte address 0x4 - core index']
  #allocation1 [shape = 'u32[144,128]{1,0:T(1,128)}', space=vmem, size = 0x12000, scoped, tag = 'internal scratch']
  %s0 = inlined_call_operand.hbm [shape: s32[1,384], index: 0, kind: input, shape index: {}]
  %s1 = inlined_call_operand.hbm [shape: f32[32,64], index: 1, kind: input, shape index: {}]
  %s2 = inlined_call_operand.hbm [shape: f32[32,384], index: 2, kind: output, shape index: {}]
  %s3 = sld [smem:[#allocation0]]
  $region49: #{tpu_custom_call.1} parent=0
    _
  %s5 = ssub.s32 1, %s3
  %s6 = scalar_select 0, %s5, %s3
  $region1: #{tpu_custom_call.1} parent=0
    #allocation2 [shape = 'u8[1024]{0}', space=vmem, size = 0x400, scoped, tag = 'input window, operand 0']
    #allocation3 [shape = 's32[2]{0}', space=sflag, size = 0x8, scoped, tag = 'scoped memory for tpu_custom_call.1']
    #allocation4 [shape = 's32[2]{0}', space=sflag, size = 0x8, scoped, tag = 'scoped memory for tpu_custom_call.1']
    #allocation5 [shape = 'u8[16384]{0}', space=vmem, size = 0x4000, scoped, tag = 'input window, operand 1, single buffered']
    #allocation6 [shape = 's32[1]{0}', space=sflag, size = 0x4, scoped, tag = 'scoped memory for tpu_custom_call.1']
    #allocation7 [shape = 'u8[32768]{0}', space=vmem, size = 0x8000, scoped, tag = 'output window, operand 0']
    %7 = vsyncpa [#allocation3], 0
    %s8 = scalar_lea.sflag [#allocation3], 1
    %9 = vsyncpa %s8, 0
    %10 = vsyncpa [#allocation6], 0
    %11 = vsyncpa [#allocation4], 0
    %s12 = scalar_lea.sflag [#allocation4], 1
    %13 = vsyncpa %s12, 0
    loop: start=0, step=1, limit=5
    $region2: #{tpu_custom_call.1} parent=1 // loop_pre_header
      _
    $region3: #{tpu_custom_call.1} parent=1 // loop_header
      %s15 = sphi 0, %s19
      %p16 = scmp.ge.s32.totalorder %s15, 5
      %s25 = sphi 0, %s27
      %s28 = sphi 0, %s25
      %s29 = sphi 0, %s28
      %s45 = sphi 0, %s29
      %s49 = sphi 0, %s49
      %s51 = sphi 0, %s49
      %s52 = sphi 0, %s51
      %s66 = sphi 0, %s52
      %s72 = sphi 0, %s74
      %s75 = sphi 0, %s72
      %s76 = sphi 0, %s75
      %s92 = sphi 0, %s76
    $region4: #{tpu_custom_call.1} parent=1 // loop_header_branch
      %18 = sbr.rel (%p16) target = $region8
    $region5: #{tpu_custom_call.1} parent=1 // loop_body
      %s20 = ssub.s32 %s15, 1
      %s21 = ssub.s32 %s15, 2
      %s22 = sadd.s32 %s15, 1
      %s23 = ssub.s32 %s15, %s22
      %p24 = scmp.eq.s32.totalorder %s23, 0
      %s26 = sadd.s32 %s25, 1
      %s27 = scalar_select %p24, %s25, %s26
      %p30 = pneg %p24
      %p31 = scmp.eq.s32.totalorder %s15, 2
      %p32 = por %p30, %p31
      %p33 = scmp.ne.s32.totalorder %s25, %s28
      %p34 = scmp.eq.s32.totalorder %s15, 0
      %p35 = por %p33, %p34
      %p36 = scmp.ne.s32.totalorder %s25, %s28
      %p37 = scmp.eq.s32.totalorder %s20, 2
      %p38 = por %p36, %p37
      %p39 = scmp.ne.s32.totalorder %s28, %s29
      %p40 = scmp.eq.s32.totalorder %s20, 0
      %p41 = por %p39, %p40
      %p42 = scmp.ne.s32.totalorder %s28, %s29
      %p43 = scmp.eq.s32.totalorder %s21, 2
      %p44 = por %p42, %p43
      %p46 = scmp.ne.s32.totalorder %s29, %s45
      %p47 = scmp.eq.s32.totalorder %s21, 0
      %p48 = por %p46, %p47
      %s50 = sadd.s32 %s49, 1
      %p53 = scmp.eq.s32.totalorder %s15, 2
      %p54 = scmp.ne.s32.totalorder %s49, %s51
      %p55 = scmp.eq.s32.totalorder %s15, 0
      %p56 = por %p54, %p55
      %p57 = scmp.ne.s32.totalorder %s49, %s51
      %p58 = scmp.eq.s32.totalorder %s20, 2
      %p59 = por %p57, %p58
      %p60 = scmp.ne.s32.totalorder %s51, %s52
      %p61 = scmp.eq.s32.totalorder %s20, 0
      %p62 = por %p60, %p61
      %p63 = scmp.ne.s32.totalorder %s51, %s52
      %p64 = scmp.eq.s32.totalorder %s21, 2
      %p65 = por %p63, %p64
      %p67 = scmp.ne.s32.totalorder %s52, %s66
      %p68 = scmp.eq.s32.totalorder %s21, 0
      %p69 = por %p67, %p68
      %s70 = ssub.s32 %s15, %s22
      %p71 = scmp.eq.s32.totalorder %s70, 0
      %s73 = sadd.s32 %s72, 1
      %s74 = scalar_select %p71, %s72, %s73
      %p77 = pneg %p71
      %p78 = scmp.eq.s32.totalorder %s15, 2
      %p79 = por %p77, %p78
      %p80 = scmp.ne.s32.totalorder %s72, %s75
      %p81 = scmp.eq.s32.totalorder %s15, 0
      %p82 = por %p80, %p81
      %p83 = scmp.ne.s32.totalorder %s72, %s75
      %p84 = scmp.eq.s32.totalorder %s20, 2
      %p85 = por %p83, %p84
      %p86 = scmp.ne.s32.totalorder %s75, %s76
      %p87 = scmp.eq.s32.totalorder %s20, 0
      %p88 = por %p86, %p87
      %p89 = scmp.ne.s32.totalorder %s75, %s76
      %p90 = scmp.eq.s32.totalorder %s21, 2
      %p91 = por %p89, %p90
      %p93 = scmp.ne.s32.totalorder %s76, %s92
      %p94 = scmp.eq.s32.totalorder %s21, 0
      %p95 = por %p93, %p94
      %p96 = scmp.le.s32.totalorder 1, %s15
      %p97 = scmp.lt.s32.totalorder %s15, 4
      %p98 = pnand %p96, %p97
      %p99 = pneg %p98
      // Predicated region
      $region9: #{tpu_custom_call.1} parent=5 // pred_check
        _
      $region10: #{tpu_custom_call.1} parent=5 // pred_check_branch
        %101 = sbr.rel (%p98) target = $region12
      $region11: #{tpu_custom_call.1} parent=5 // pred_region
        %s102 = ssub.s32 %s15, 1
        // Predicated region
        $region13: #{tpu_custom_call.1} parent=11 // pred_check
          %p103 = pneg %p62
        $region14: #{tpu_custom_call.1} parent=11 // pred_check_branch
          %105 = sbr.rel (%p103) target = $region16
        $region15: #{tpu_custom_call.1} parent=11 // pred_region
          %s107 = ssub.s32 512, 512
          %108 = vsyncadd [#allocation6], %s107
          %s109 = sshll.u32 [#allocation5], 4
          %s110 = int_to_ptr.vmem [resolvable:$true] %s109
          %115 = dma.hbm_to_vmem [thread:$0]  %s1, 512, %s110, [#allocation6], 128, 128, 8
        $region16: #{tpu_custom_call.1} parent=11 // pred_fallthru
          _
      $region12: #{tpu_custom_call.1} parent=5 // pred_fallthru
        _
      %p116 = scmp.lt.s32.totalorder %s15, 3
      // Predicated region
      $region17: #{tpu_custom_call.1} parent=5 // pred_check
        %p117 = pneg %p116
      $region18: #{tpu_custom_call.1} parent=5 // pred_check_branch
        %119 = sbr.rel (%p117) target = $region20
      $region19: #{tpu_custom_call.1} parent=5 // pred_region
        // Predicated region
        $region21: #{tpu_custom_call.1} parent=19 // pred_check
          %p120 = pneg %p35
        $region22: #{tpu_custom_call.1} parent=19 // pred_check_branch
          %122 = sbr.rel (%p120) target = $region24
        $region23: #{tpu_custom_call.1} parent=19 // pred_region
          %s123 = sand.u32 %s25, 1
          %s124 = scalar_lea.sflag [#allocation3], %s123
          %s125 = sand.u32 %s25, 1
          %s126 = scalar_lea.vmem [#allocation2], %s125
          %s128 = ssub.s32 16, 16
          %129 = vsyncadd %s124, %s128
          %s130 = smul.addr %s15, 16
          %s131 = scalar_lea.hbm %s0, %s130
          %s133 = sshll.u32 %s126, 4
          %s134 = int_to_ptr.vmem [resolvable:$true] %s133
          %136 = dma.hbm_to_vmem [thread:$0]  %s131, 16, %s134, %s124
        $region24: #{tpu_custom_call.1} parent=19 // pred_fallthru
          _
      $region20: #{tpu_custom_call.1} parent=5 // pred_fallthru
        _
      %p137 = scmp.le.s32.totalorder 1, %s15
      %p138 = scmp.lt.s32.totalorder %s15, 4
      %p139 = pnand %p137, %p138
      %p140 = pneg %p139
      // Predicated region
      $region25: #{tpu_custom_call.1} parent=5 // pred_check
        _
      $region26: #{tpu_custom_call.1} parent=5 // pred_check_branch
        %142 = sbr.rel (%p139) target = $region28
      $region27: #{tpu_custom_call.1} parent=5 // pred_region
        %s143 = ssub.s32 %s15, 1
        %s144 = sand.u32 %s28, 1
        %s145 = scalar_lea.sflag [#allocation3], %s144
        %s146 = sand.u32 %s28, 1
        %s147 = scalar_lea.vmem [#allocation2], %s146
        // Predicated region
        $region29: #{tpu_custom_call.1} parent=27 // pred_check
          %p148 = pneg %p41
        $region30: #{tpu_custom_call.1} parent=27 // pred_check_branch
          %150 = sbr.rel (%p148) target = $region32
        $region31: #{tpu_custom_call.1} parent=27 // pred_region
          %151 = dma.done %s145, 16
        $region32: #{tpu_custom_call.1} parent=27 // pred_fallthru
          _
        // Predicated region
        $region33: #{tpu_custom_call.1} parent=27 // pred_check
          %p152 = pneg %p62
        $region34: #{tpu_custom_call.1} parent=27 // pred_check_branch
          %154 = sbr.rel (%p152) target = $region36
        $region35: #{tpu_custom_call.1} parent=27 // pred_region
          %155 = dma.done [#allocation6], 512
        $region36: #{tpu_custom_call.1} parent=27 // pred_fallthru
          _
        %s156 = sand.u32 %s28, 1
        %s157 = scalar_lea.sflag [#allocation3], %s156
        %s158 = sand.u32 %s28, 1
        %s159 = scalar_lea.vmem [#allocation2], %s158
        %p160 = pneg %p41
        %p161 = pneg %p38
        %p162 = pneg %p62
        %p163 = pneg %p59
        %p164 = pneg %p88
        %p165 = pneg %p85
        %s166 = sand.u32 %s75, 1
        %s167 = scalar_lea.sflag [#allocation4], %s166
        %s168 = sand.u32 %s75, 1
        %s169 = smul.addr %s168, 32
        %s170 = scalar_lea.vmem [#allocation7], %s169
        %v171 = vld [vmem:[%s147] sm:$0x1]
        %v172 = vlaneseq
        %v173 = vshrl.u32 %v172, 7
        %v174 = vadd.s32 %v173, 8
        %v175 = vadd.s32 %v173, 16
        %v176 = vadd.s32 %v173, 24
        %v177 = vadd.s32 %v173, 32
        %v178 = vadd.s32 %v173, 40
        %v179 = vadd.s32 %v173, 48
        %v180 = vadd.s32 %v173, 56
        %v181 = vlaneseq
        %v182 = vshrl.u32 %v181, 7
        %v183 = vsub.s32 0, %v182
        %v184 = vrot.slane %v171, %v183
        %vm185 = vcmp.eq.s32.totalorder %v173, %v184
        %vm186 = vcmp.eq.s32.totalorder %v174, %v184
        %vm187 = vcmp.eq.s32.totalorder %v175, %v184
        %vm188 = vcmp.eq.s32.totalorder %v176, %v184
        %vm189 = vcmp.eq.s32.totalorder %v177, %v184
        %vm190 = vcmp.eq.s32.totalorder %v178, %v184
        %vm191 = vcmp.eq.s32.totalorder %v179, %v184
        %vm192 = vcmp.eq.s32.totalorder %v180, %v184
        %v193 = vsel %vm185, 1, 0
        %v194 = vsel %vm186, 1, 0
        %v195 = vsel %vm187, 1, 0
        %v196 = vsel %vm188, 1, 0
        %v197 = vsel %vm189, 1, 0
        %v198 = vsel %vm190, 1, 0
        %v199 = vsel %vm191, 1, 0
        %v200 = vsel %vm192, 1, 0
        %v201 = vcvt.s32.f32 %v193
        %v202 = vcvt.s32.f32 %v194
        %v203 = vcvt.s32.f32 %v195
        %v204 = vcvt.s32.f32 %v196
        %v205 = vcvt.s32.f32 %v197
        %v206 = vcvt.s32.f32 %v198
        %v207 = vcvt.s32.f32 %v199
        %v208 = vcvt.s32.f32 %v200
        %v209 = vld [vmem:[#allocation5] sm:$0xff]
        %v210 = vld [vmem:[#allocation5 + $0x8] sm:$0xff]
        %v211 = vld [vmem:[#allocation5 + $0x10] sm:$0xff]
        %v212 = vld [vmem:[#allocation5 + $0x18] sm:$0xff]
        %vm213 = vcmask 523264
        %v215 = vsel %vm213, %v209, 0
        %v218 = vsel %vm213, %v210, 0
        %v221 = vsel %vm213, %v211, 0
        %v224 = vsel %vm213, %v212, 0
        %226 = vmatprep.subr.mxu0 0.0
        %227 = vmatpush1.msra.mxu0 0.0
        %228 = vmatprep.subr.mxu0 0.0
        %229 = vmatpush1.msra.mxu0 0.0
        %230 = vmatprep.subr.mxu0 0.0
        %231 = vmatpush1.msra.mxu0 0.0
        %232 = vmatprep.subr.mxu0 0.0
        %233 = vmatpush1.msra.mxu0 0.0
        %234 = vmatprep.subr.mxu0 0.0
        %235 = vmatpush1.msra.mxu0 0.0
        %236 = vmatprep.subr.mxu0 0.0
        %237 = vmatpush1.msra.mxu0 0.0
        %238 = vmatprep.subr.mxu0 0.0
        %239 = vmatpush1.msra.mxu0 0.0
        %240 = vmatprep.subr.mxu0 0.0
        %241 = vmatpush1.msra.mxu0 0.0
        %242 = vmatprep.subr.mxu0 0.0
        %v243 = vand.u32 %v208, 4294901760
        %244 = vmatpush1.msra.mxu0 %v243
        %245 = vmatprep.subr.mxu0 0.0
        %v246 = vand.u32 %v207, 4294901760
        %247 = vmatpush1.msra.mxu0 %v246
        %248 = vmatprep.subr.mxu0 0.0
        %v249 = vand.u32 %v206, 4294901760
        %250 = vmatpush1.msra.mxu0 %v249
        %251 = vmatprep.subr.mxu0 0.0
        %v252 = vand.u32 %v205, 4294901760
        %253 = vmatpush1.msra.mxu0 %v252
        %254 = vmatprep.subr.mxu0 0.0
        %v255 = vand.u32 %v204, 4294901760
        %256 = vmatpush1.msra.mxu0 %v255
        %257 = vmatprep.subr.mxu0 0.0
        %v258 = vand.u32 %v203, 4294901760
        %259 = vmatpush1.msra.mxu0 %v258
        %260 = vmatprep.subr.mxu0 0.0
        %v261 = vand.u32 %v202, 4294901760
        %262 = vmatpush1.msra.mxu0 %v261
        %263 = vmatprep.subr.mxu0 0.0
        %v264 = vand.u32 %v201, 4294901760
        %265 = vmatpush1.msra.mxu0 %v264
        %266 = vmatprep.subr.mxu0 0.0
        %267 = vmatpush2.msra.mxu0 0.0
        %268 = vmatprep.subr.mxu0 0.0
        %269 = vmatpush2.msra.mxu0 0.0
        %270 = vmatprep.subr.mxu0 0.0
        %271 = vmatpush2.msra.mxu0 0.0
        %272 = vmatprep.subr.mxu0 0.0
        %273 = vmatpush2.msra.mxu0 0.0
        %274 = vmatprep.subr.mxu0 0.0
        %275 = vmatpush2.msra.mxu0 0.0
        %276 = vmatprep.subr.mxu0 0.0
        %277 = vmatpush2.msra.mxu0 0.0
        %278 = vmatprep.subr.mxu0 0.0
        %279 = vmatpush2.msra.mxu0 0.0
        %280 = vmatprep.subr.mxu0 0.0
        %281 = vmatpush2.msra.mxu0 0.0
        %282 = vmatprep.subr.mxu0 0.0
        %283 = vmatpush2.msra.mxu0 0.0
        %284 = vmatprep.subr.mxu0 0.0
        %285 = vmatpush2.msra.mxu0 0.0
        %286 = vmatprep.subr.mxu0 0.0
        %287 = vmatpush2.msra.mxu0 0.0
        %288 = vmatprep.subr.mxu0 0.0
        %289 = vmatpush2.msra.mxu0 0.0
        %290 = vmatprep.subr.mxu0 0.0
        %291 = vmatpush2.msra.mxu0 0.0
        %292 = vmatprep.subr.mxu0 0.0
        %293 = vmatpush2.msra.mxu0 0.0
        %294 = vmatprep.subr.mxu0 0.0
        %295 = vmatpush2.msra.mxu0 0.0
        %296 = vmatprep.subr.mxu0 0.0
        %297 = vmatpush2.msra.mxu0 0.0
        %298 = vmatprep.mubr.f32.mxu0 0.0
        %v299 = vand.u32 %v215, 4294901760
        %v300 = vsub.f32 %v215, %v299
        %v301 = vand.u32 %v300, 4294901760
        %v302 = vsub.f32 %v300, %v301
        %v303 = vand.u32 %v302, 4294901760
        %304 = vmatmul.mubr.f32.gmra.mxu0 %v303
        %v305 = vpop.f32.mrf.mxu0
        %v306 = vadd.f32 0.0, %v305
        %v307 = vpop.f32.mrf.mxu0
        %308 = vmatprep.mubr.f32.mxu0 0.0
        %v309 = vand.u32 %v218, 4294901760
        %v310 = vsub.f32 %v218, %v309
        %v311 = vand.u32 %v310, 4294901760
        %v312 = vsub.f32 %v310, %v311
        %v313 = vand.u32 %v312, 4294901760
        %314 = vmatmul.mubr.f32.gmra.mxu0 %v313
        %v315 = vpop.f32.mrf.mxu0
        %v316 = vadd.f32 0.0, %v315
        %v317 = vpop.f32.mrf.mxu0
        %318 = vmatprep.mubr.f32.mxu0 0.0
        %v319 = vand.u32 %v221, 4294901760
        %v320 = vsub.f32 %v221, %v319
        %v321 = vand.u32 %v320, 4294901760
        %v322 = vsub.f32 %v320, %v321
        %v323 = vand.u32 %v322, 4294901760
        %324 = vmatmul.mubr.f32.gmra.mxu0 %v323
        %v325 = vpop.f32.mrf.mxu0
        %v326 = vadd.f32 0.0, %v325
        %v327 = vpop.f32.mrf.mxu0
        %328 = vmatprep.mubr.f32.mxu0 0.0
        %v329 = vand.u32 %v224, 4294901760
        %v330 = vsub.f32 %v224, %v329
        %v331 = vand.u32 %v330, 4294901760
        %v332 = vsub.f32 %v330, %v331
        %v333 = vand.u32 %v332, 4294901760
        %334 = vmatmul.mubr.f32.gmra.mxu0 %v333
        %v335 = vpop.f32.mrf.mxu0
        %v336 = vadd.f32 0.0, %v335
        %v337 = vpop.f32.mrf.mxu0
        %338 = vdwg.mxu0
        %339 = vmatprep.subr.mxu0 0.0
        %340 = vmatpush1.msra.mxu0 0.0
        %341 = vmatprep.subr.mxu0 0.0
        %342 = vmatpush1.msra.mxu0 0.0
        %343 = vmatprep.subr.mxu0 0.0
        %344 = vmatpush1.msra.mxu0 0.0
        %345 = vmatprep.subr.mxu0 0.0
        %346 = vmatpush1.msra.mxu0 0.0
        %347 = vmatprep.subr.mxu0 0.0
        %348 = vmatpush1.msra.mxu0 0.0
        %349 = vmatprep.subr.mxu0 0.0
        %350 = vmatpush1.msra.mxu0 0.0
        %351 = vmatprep.subr.mxu0 0.0
        %352 = vmatpush1.msra.mxu0 0.0
        %353 = vmatprep.subr.mxu0 0.0
        %354 = vmatpush1.msra.mxu0 0.0
        %355 = vmatprep.subr.mxu0 0.0
        %v356 = vand.u32 %v208, 4294901760
        %v357 = vsub.f32 %v208, %v356
        %v358 = vand.u32 %v357, 4294901760
        %v359 = vsub.f32 %v357, %v358
        %v360 = vand.u32 %v359, 4294901760
        %361 = vmatpush1.msra.mxu0 %v360
        %362 = vmatprep.subr.mxu0 0.0
        %v363 = vand.u32 %v207, 4294901760
        %v364 = vsub.f32 %v207, %v363
        %v365 = vand.u32 %v364, 4294901760
        %v366 = vsub.f32 %v364, %v365
        %v367 = vand.u32 %v366, 4294901760
        %368 = vmatpush1.msra.mxu0 %v367
        %369 = vmatprep.subr.mxu0 0.0
        %v370 = vand.u32 %v206, 4294901760
        %v371 = vsub.f32 %v206, %v370
        %v372 = vand.u32 %v371, 4294901760
        %v373 = vsub.f32 %v371, %v372
        %v374 = vand.u32 %v373, 4294901760
        %375 = vmatpush1.msra.mxu0 %v374
        %376 = vmatprep.subr.mxu0 0.0
        %v377 = vand.u32 %v205, 4294901760
        %v378 = vsub.f32 %v205, %v377
        %v379 = vand.u32 %v378, 4294901760
        %v380 = vsub.f32 %v378, %v379
        %v381 = vand.u32 %v380, 4294901760
        %382 = vmatpush1.msra.mxu0 %v381
        %383 = vmatprep.subr.mxu0 0.0
        %v384 = vand.u32 %v204, 4294901760
        %v385 = vsub.f32 %v204, %v384
        %v386 = vand.u32 %v385, 4294901760
        %v387 = vsub.f32 %v385, %v386
        %v388 = vand.u32 %v387, 4294901760
        %389 = vmatpush1.msra.mxu0 %v388
        %390 = vmatprep.subr.mxu0 0.0
        %v391 = vand.u32 %v203, 4294901760
        %v392 = vsub.f32 %v203, %v391
        %v393 = vand.u32 %v392, 4294901760
        %v394 = vsub.f32 %v392, %v393
        %v395 = vand.u32 %v394, 4294901760
        %396 = vmatpush1.msra.mxu0 %v395
        %397 = vmatprep.subr.mxu0 0.0
        %v398 = vand.u32 %v202, 4294901760
        %v399 = vsub.f32 %v202, %v398
        %v400 = vand.u32 %v399, 4294901760
        %v401 = vsub.f32 %v399, %v400
        %v402 = vand.u32 %v401, 4294901760
        %403 = vmatpush1.msra.mxu0 %v402
        %404 = vmatprep.subr.mxu0 0.0
        %v405 = vand.u32 %v201, 4294901760
        %v406 = vsub.f32 %v201, %v405
        %v407 = vand.u32 %v406, 4294901760
        %v408 = vsub.f32 %v406, %v407
        %v409 = vand.u32 %v408, 4294901760
        %410 = vmatpush1.msra.mxu0 %v409
        %411 = vmatprep.subr.mxu0 0.0
        %412 = vmatpush2.msra.mxu0 0.0
        %413 = vmatprep.subr.mxu0 0.0
        %414 = vmatpush2.msra.mxu0 0.0
        %415 = vmatprep.subr.mxu0 0.0
        %416 = vmatpush2.msra.mxu0 0.0
        %417 = vmatprep.subr.mxu0 0.0
        %418 = vmatpush2.msra.mxu0 0.0
        %419 = vmatprep.subr.mxu0 0.0
        %420 = vmatpush2.msra.mxu0 0.0
        %421 = vmatprep.subr.mxu0 0.0
        %422 = vmatpush2.msra.mxu0 0.0
        %423 = vmatprep.subr.mxu0 0.0
        %424 = vmatpush2.msra.mxu0 0.0
        %425 = vmatprep.subr.mxu0 0.0
        %426 = vmatpush2.msra.mxu0 0.0
        %427 = vmatprep.subr.mxu0 0.0
        %428 = vmatpush2.msra.mxu0 0.0
        %429 = vmatprep.subr.mxu0 0.0
        %430 = vmatpush2.msra.mxu0 0.0
        %431 = vmatprep.subr.mxu0 0.0
        %432 = vmatpush2.msra.mxu0 0.0
        %433 = vmatprep.subr.mxu0 0.0
        %434 = vmatpush2.msra.mxu0 0.0
        %435 = vmatprep.subr.mxu0 0.0
        %436 = vmatpush2.msra.mxu0 0.0
        %437 = vmatprep.subr.mxu0 0.0
        %438 = vmatpush2.msra.mxu0 0.0
        %439 = vmatprep.subr.mxu0 0.0
        %440 = vmatpush2.msra.mxu0 0.0
        %441 = vmatprep.subr.mxu0 0.0
        %442 = vmatpush2.msra.mxu0 0.0
        %443 = vmatprep.mubr.f32.mxu0 0.0
        %v444 = vand.u32 %v215, 4294901760
        %445 = vmatmul.mubr.f32.gmra.mxu0 %v444
        %v446 = vpop.f32.mrf.mxu0
        %v447 = vadd.f32 %v306, %v446
        %v448 = vpop.f32.mrf.mxu0
        %449 = vmatprep.mubr.f32.mxu0 0.0
        %v450 = vand.u32 %v218, 4294901760
        %451 = vmatmul.mubr.f32.gmra.mxu0 %v450
        %v452 = vpop.f32.mrf.mxu0
        %v453 = vadd.f32 %v316, %v452
        %v454 = vpop.f32.mrf.mxu0
        %455 = vmatprep.mubr.f32.mxu0 0.0
        %v456 = vand.u32 %v221, 4294901760
        %457 = vmatmul.mubr.f32.gmra.mxu0 %v456
        %v458 = vpop.f32.mrf.mxu0
        %v459 = vadd.f32 %v326, %v458
        %v460 = vpop.f32.mrf.mxu0
        %461 = vmatprep.mubr.f32.mxu0 0.0
        %v462 = vand.u32 %v224, 4294901760
        %463 = vmatmul.mubr.f32.gmra.mxu0 %v462
        %v464 = vpop.f32.mrf.mxu0
        %v465 = vadd.f32 %v336, %v464
        %v466 = vpop.f32.mrf.mxu0
        %467 = vdwg.mxu0
        %468 = vmatprep.subr.mxu0 0.0
        %469 = vmatpush1.msra.mxu0 0.0
        %470 = vmatprep.subr.mxu0 0.0
        %471 = vmatpush1.msra.mxu0 0.0
        %472 = vmatprep.subr.mxu0 0.0
        %473 = vmatpush1.msra.mxu0 0.0
        %474 = vmatprep.subr.mxu0 0.0
        %475 = vmatpush1.msra.mxu0 0.0
        %476 = vmatprep.subr.mxu0 0.0
        %477 = vmatpush1.msra.mxu0 0.0
        %478 = vmatprep.subr.mxu0 0.0
        %479 = vmatpush1.msra.mxu0 0.0
        %480 = vmatprep.subr.mxu0 0.0
        %481 = vmatpush1.msra.mxu0 0.0
        %482 = vmatprep.subr.mxu0 0.0
        %483 = vmatpush1.msra.mxu0 0.0
        %484 = vmatprep.subr.mxu0 0.0
        %v485 = vand.u32 %v208, 4294901760
        %v486 = vsub.f32 %v208, %v485
        %487 = vmatpush1.msra.mxu0 %v486
        %488 = vmatprep.subr.mxu0 0.0
        %v489 = vand.u32 %v207, 4294901760
        %v490 = vsub.f32 %v207, %v489
        %491 = vmatpush1.msra.mxu0 %v490
        %492 = vmatprep.subr.mxu0 0.0
        %v493 = vand.u32 %v206, 4294901760
        %v494 = vsub.f32 %v206, %v493
        %495 = vmatpush1.msra.mxu0 %v494
        %496 = vmatprep.subr.mxu0 0.0
        %v497 = vand.u32 %v205, 4294901760
        %v498 = vsub.f32 %v205, %v497
        %499 = vmatpush1.msra.mxu0 %v498
        %500 = vmatprep.subr.mxu0 0.0
        %v501 = vand.u32 %v204, 4294901760
        %v502 = vsub.f32 %v204, %v501
        %503 = vmatpush1.msra.mxu0 %v502
        %504 = vmatprep.subr.mxu0 0.0
        %v505 = vand.u32 %v203, 4294901760
        %v506 = vsub.f32 %v203, %v505
        %507 = vmatpush1.msra.mxu0 %v506
        %508 = vmatprep.subr.mxu0 0.0
        %v509 = vand.u32 %v202, 4294901760
        %v510 = vsub.f32 %v202, %v509
        %511 = vmatpush1.msra.mxu0 %v510
        %512 = vmatprep.subr.mxu0 0.0
        %v513 = vand.u32 %v201, 4294901760
        %v514 = vsub.f32 %v201, %v513
        %515 = vmatpush1.msra.mxu0 %v514
        %516 = vmatprep.subr.mxu0 0.0
        %517 = vmatpush2.msra.mxu0 0.0
        %518 = vmatprep.subr.mxu0 0.0
        %519 = vmatpush2.msra.mxu0 0.0
        %520 = vmatprep.subr.mxu0 0.0
        %521 = vmatpush2.msra.mxu0 0.0
        %522 = vmatprep.subr.mxu0 0.0
        %523 = vmatpush2.msra.mxu0 0.0
        %524 = vmatprep.subr.mxu0 0.0
        %525 = vmatpush2.msra.mxu0 0.0
        %526 = vmatprep.subr.mxu0 0.0
        %527 = vmatpush2.msra.mxu0 0.0
        %528 = vmatprep.subr.mxu0 0.0
        %529 = vmatpush2.msra.mxu0 0.0
        %530 = vmatprep.subr.mxu0 0.0
        %531 = vmatpush2.msra.mxu0 0.0
        %532 = vmatprep.subr.mxu0 0.0
        %533 = vmatpush2.msra.mxu0 0.0
        %534 = vmatprep.subr.mxu0 0.0
        %535 = vmatpush2.msra.mxu0 0.0
        %536 = vmatprep.subr.mxu0 0.0
        %537 = vmatpush2.msra.mxu0 0.0
        %538 = vmatprep.subr.mxu0 0.0
        %539 = vmatpush2.msra.mxu0 0.0
        %540 = vmatprep.subr.mxu0 0.0
        %541 = vmatpush2.msra.mxu0 0.0
        %542 = vmatprep.subr.mxu0 0.0
        %543 = vmatpush2.msra.mxu0 0.0
        %544 = vmatprep.subr.mxu0 0.0
        %545 = vmatpush2.msra.mxu0 0.0
        %546 = vmatprep.subr.mxu0 0.0
        %547 = vmatpush2.msra.mxu0 0.0
        %548 = vmatprep.mubr.f32.mxu0 0.0
        %v549 = vand.u32 %v215, 4294901760
        %v550 = vsub.f32 %v215, %v549
        %551 = vmatmul.mubr.f32.gmra.mxu0 %v550
        %v552 = vpop.f32.mrf.mxu0
        %v553 = vadd.f32 %v447, %v552
        %v554 = vpop.f32.mrf.mxu0
        %555 = vmatprep.mubr.f32.mxu0 0.0
        %v556 = vand.u32 %v218, 4294901760
        %v557 = vsub.f32 %v218, %v556
        %558 = vmatmul.mubr.f32.gmra.mxu0 %v557
        %v559 = vpop.f32.mrf.mxu0
        %v560 = vadd.f32 %v453, %v559
        %v561 = vpop.f32.mrf.mxu0
        %562 = vmatprep.mubr.f32.mxu0 0.0
        %v563 = vand.u32 %v221, 4294901760
        %v564 = vsub.f32 %v221, %v563
        %565 = vmatmul.mubr.f32.gmra.mxu0 %v564
        %v566 = vpop.f32.mrf.mxu0
        %v567 = vadd.f32 %v459, %v566
        %v568 = vpop.f32.mrf.mxu0
        %569 = vmatprep.mubr.f32.mxu0 0.0
        %v570 = vand.u32 %v224, 4294901760
        %v571 = vsub.f32 %v224, %v570
        %572 = vmatmul.mubr.f32.gmra.mxu0 %v571
        %v573 = vpop.f32.mrf.mxu0
        %v574 = vadd.f32 %v465, %v573
        %v575 = vpop.f32.mrf.mxu0
        %576 = vdwg.mxu0
        %577 = vmatprep.subr.mxu0 0.0
        %578 = vmatpush1.msra.mxu0 0.0
        %579 = vmatprep.subr.mxu0 0.0
        %580 = vmatpush1.msra.mxu0 0.0
        %581 = vmatprep.subr.mxu0 0.0
        %582 = vmatpush1.msra.mxu0 0.0
        %583 = vmatprep.subr.mxu0 0.0
        %584 = vmatpush1.msra.mxu0 0.0
        %585 = vmatprep.subr.mxu0 0.0
        %586 = vmatpush1.msra.mxu0 0.0
        %587 = vmatprep.subr.mxu0 0.0
        %588 = vmatpush1.msra.mxu0 0.0
        %589 = vmatprep.subr.mxu0 0.0
        %590 = vmatpush1.msra.mxu0 0.0
        %591 = vmatprep.subr.mxu0 0.0
        %592 = vmatpush1.msra.mxu0 0.0
        %593 = vmatprep.subr.mxu0 0.0
        %v594 = vand.u32 %v208, 4294901760
        %595 = vmatpush1.msra.mxu0 %v594
        %596 = vmatprep.subr.mxu0 0.0
        %v597 = vand.u32 %v207, 4294901760
        %598 = vmatpush1.msra.mxu0 %v597
        %599 = vmatprep.subr.mxu0 0.0
        %v600 = vand.u32 %v206, 4294901760
        %601 = vmatpush1.msra.mxu0 %v600
        %602 = vmatprep.subr.mxu0 0.0
        %v603 = vand.u32 %v205, 4294901760
        %604 = vmatpush1.msra.mxu0 %v603
        %605 = vmatprep.subr.mxu0 0.0
        %v606 = vand.u32 %v204, 4294901760
        %607 = vmatpush1.msra.mxu0 %v606
        %608 = vmatprep.subr.mxu0 0.0
        %v609 = vand.u32 %v203, 4294901760
        %610 = vmatpush1.msra.mxu0 %v609
        %611 = vmatprep.subr.mxu0 0.0
        %v612 = vand.u32 %v202, 4294901760
        %613 = vmatpush1.msra.mxu0 %v612
        %614 = vmatprep.subr.mxu0 0.0
        %v615 = vand.u32 %v201, 4294901760
        %616 = vmatpush1.msra.mxu0 %v615
        %617 = vmatprep.subr.mxu0 0.0
        %618 = vmatpush2.msra.mxu0 0.0
        %619 = vmatprep.subr.mxu0 0.0
        %620 = vmatpush2.msra.mxu0 0.0
        %621 = vmatprep.subr.mxu0 0.0
        %622 = vmatpush2.msra.mxu0 0.0
        %623 = vmatprep.subr.mxu0 0.0
        %624 = vmatpush2.msra.mxu0 0.0
        %625 = vmatprep.subr.mxu0 0.0
        %626 = vmatpush2.msra.mxu0 0.0
        %627 = vmatprep.subr.mxu0 0.0
        %628 = vmatpush2.msra.mxu0 0.0
        %629 = vmatprep.subr.mxu0 0.0
        %630 = vmatpush2.msra.mxu0 0.0
        %631 = vmatprep.subr.mxu0 0.0
        %632 = vmatpush2.msra.mxu0 0.0
        %633 = vmatprep.subr.mxu0 0.0
        %634 = vmatpush2.msra.mxu0 0.0
        %635 = vmatprep.subr.mxu0 0.0
        %636 = vmatpush2.msra.mxu0 0.0
        %637 = vmatprep.subr.mxu0 0.0
        %638 = vmatpush2.msra.mxu0 0.0
        %639 = vmatprep.subr.mxu0 0.0
        %640 = vmatpush2.msra.mxu0 0.0
        %641 = vmatprep.subr.mxu0 0.0
        %642 = vmatpush2.msra.mxu0 0.0
        %643 = vmatprep.subr.mxu0 0.0
        %644 = vmatpush2.msra.mxu0 0.0
        %645 = vmatprep.subr.mxu0 0.0
        %646 = vmatpush2.msra.mxu0 0.0
        %647 = vmatprep.subr.mxu0 0.0
        %648 = vmatpush2.msra.mxu0 0.0
        %649 = vmatprep.mubr.f32.mxu0 0.0
        %v650 = vand.u32 %v215, 4294901760
        %v651 = vsub.f32 %v215, %v650
        %v652 = vand.u32 %v651, 4294901760
        %653 = vmatmul.mubr.f32.gmra.mxu0 %v652
        %v654 = vpop.f32.mrf.mxu0
        %v655 = vadd.f32 %v553, %v654
        %v656 = vpop.f32.mrf.mxu0
        %657 = vmatprep.mubr.f32.mxu0 0.0
        %v658 = vand.u32 %v218, 4294901760
        %v659 = vsub.f32 %v218, %v658
        %v660 = vand.u32 %v659, 4294901760
        %661 = vmatmul.mubr.f32.gmra.mxu0 %v660
        %v662 = vpop.f32.mrf.mxu0
        %v663 = vadd.f32 %v560, %v662
        %v664 = vpop.f32.mrf.mxu0
        %665 = vmatprep.mubr.f32.mxu0 0.0
        %v666 = vand.u32 %v221, 4294901760
        %v667 = vsub.f32 %v221, %v666
        %v668 = vand.u32 %v667, 4294901760
        %669 = vmatmul.mubr.f32.gmra.mxu0 %v668
        %v670 = vpop.f32.mrf.mxu0
        %v671 = vadd.f32 %v567, %v670
        %v672 = vpop.f32.mrf.mxu0
        %673 = vmatprep.mubr.f32.mxu0 0.0
        %v674 = vand.u32 %v224, 4294901760
        %v675 = vsub.f32 %v224, %v674
        %v676 = vand.u32 %v675, 4294901760
        %677 = vmatmul.mubr.f32.gmra.mxu0 %v676
        %v678 = vpop.f32.mrf.mxu0
        %v679 = vadd.f32 %v574, %v678
        %v680 = vpop.f32.mrf.mxu0
        %681 = vdwg.mxu0
        %682 = vmatprep.subr.mxu0 0.0
        %683 = vmatpush1.msra.mxu0 0.0
        %684 = vmatprep.subr.mxu0 0.0
        %685 = vmatpush1.msra.mxu0 0.0
        %686 = vmatprep.subr.mxu0 0.0
        %687 = vmatpush1.msra.mxu0 0.0
        %688 = vmatprep.subr.mxu0 0.0
        %689 = vmatpush1.msra.mxu0 0.0
        %690 = vmatprep.subr.mxu0 0.0
        %691 = vmatpush1.msra.mxu0 0.0
        %692 = vmatprep.subr.mxu0 0.0
        %693 = vmatpush1.msra.mxu0 0.0
        %694 = vmatprep.subr.mxu0 0.0
        %695 = vmatpush1.msra.mxu0 0.0
        %696 = vmatprep.subr.mxu0 0.0
        %697 = vmatpush1.msra.mxu0 0.0
        %698 = vmatprep.subr.mxu0 0.0
        %v699 = vand.u32 %v208, 4294901760
        %v700 = vsub.f32 %v208, %v699
        %v701 = vand.u32 %v700, 4294901760
        %702 = vmatpush1.msra.mxu0 %v701
        %703 = vmatprep.subr.mxu0 0.0
        %v704 = vand.u32 %v207, 4294901760
        %v705 = vsub.f32 %v207, %v704
        %v706 = vand.u32 %v705, 4294901760
        %707 = vmatpush1.msra.mxu0 %v706
        %708 = vmatprep.subr.mxu0 0.0
        %v709 = vand.u32 %v206, 4294901760
        %v710 = vsub.f32 %v206, %v709
        %v711 = vand.u32 %v710, 4294901760
        %712 = vmatpush1.msra.mxu0 %v711
        %713 = vmatprep.subr.mxu0 0.0
        %v714 = vand.u32 %v205, 4294901760
        %v715 = vsub.f32 %v205, %v714
        %v716 = vand.u32 %v715, 4294901760
        %717 = vmatpush1.msra.mxu0 %v716
        %718 = vmatprep.subr.mxu0 0.0
        %v719 = vand.u32 %v204, 4294901760
        %v720 = vsub.f32 %v204, %v719
        %v721 = vand.u32 %v720, 4294901760
        %722 = vmatpush1.msra.mxu0 %v721
        %723 = vmatprep.subr.mxu0 0.0
        %v724 = vand.u32 %v203, 4294901760
        %v725 = vsub.f32 %v203, %v724
        %v726 = vand.u32 %v725, 4294901760
        %727 = vmatpush1.msra.mxu0 %v726
        %728 = vmatprep.subr.mxu0 0.0
        %v729 = vand.u32 %v202, 4294901760
        %v730 = vsub.f32 %v202, %v729
        %v731 = vand.u32 %v730, 4294901760
        %732 = vmatpush1.msra.mxu0 %v731
        %733 = vmatprep.subr.mxu0 0.0
        %v734 = vand.u32 %v201, 4294901760
        %v735 = vsub.f32 %v201, %v734
        %v736 = vand.u32 %v735, 4294901760
        %737 = vmatpush1.msra.mxu0 %v736
        %738 = vmatprep.subr.mxu0 0.0
        %739 = vmatpush2.msra.mxu0 0.0
        %740 = vmatprep.subr.mxu0 0.0
        %741 = vmatpush2.msra.mxu0 0.0
        %742 = vmatprep.subr.mxu0 0.0
        %743 = vmatpush2.msra.mxu0 0.0
        %744 = vmatprep.subr.mxu0 0.0
        %745 = vmatpush2.msra.mxu0 0.0
        %746 = vmatprep.subr.mxu0 0.0
        %747 = vmatpush2.msra.mxu0 0.0
        %748 = vmatprep.subr.mxu0 0.0
        %749 = vmatpush2.msra.mxu0 0.0
        %750 = vmatprep.subr.mxu0 0.0
        %751 = vmatpush2.msra.mxu0 0.0
        %752 = vmatprep.subr.mxu0 0.0
        %753 = vmatpush2.msra.mxu0 0.0
        %754 = vmatprep.subr.mxu0 0.0
        %755 = vmatpush2.msra.mxu0 0.0
        %756 = vmatprep.subr.mxu0 0.0
        %757 = vmatpush2.msra.mxu0 0.0
        %758 = vmatprep.subr.mxu0 0.0
        %759 = vmatpush2.msra.mxu0 0.0
        %760 = vmatprep.subr.mxu0 0.0
        %761 = vmatpush2.msra.mxu0 0.0
        %762 = vmatprep.subr.mxu0 0.0
        %763 = vmatpush2.msra.mxu0 0.0
        %764 = vmatprep.subr.mxu0 0.0
        %765 = vmatpush2.msra.mxu0 0.0
        %766 = vmatprep.subr.mxu0 0.0
        %767 = vmatpush2.msra.mxu0 0.0
        %768 = vmatprep.subr.mxu0 0.0
        %769 = vmatpush2.msra.mxu0 0.0
        %770 = vmatprep.mubr.f32.mxu0 0.0
        %v771 = vand.u32 %v215, 4294901760
        %772 = vmatmul.mubr.f32.gmra.mxu0 %v771
        %v773 = vpop.f32.mrf.mxu0
        %v774 = vadd.f32 %v655, %v773
        %v775 = vpop.f32.mrf.mxu0
        %776 = vmatprep.mubr.f32.mxu0 0.0
        %v777 = vand.u32 %v218, 4294901760
        %778 = vmatmul.mubr.f32.gmra.mxu0 %v777
        %v779 = vpop.f32.mrf.mxu0
        %v780 = vadd.f32 %v663, %v779
        %v781 = vpop.f32.mrf.mxu0
        %782 = vmatprep.mubr.f32.mxu0 0.0
        %v783 = vand.u32 %v221, 4294901760
        %784 = vmatmul.mubr.f32.gmra.mxu0 %v783
        %v785 = vpop.f32.mrf.mxu0
        %v786 = vadd.f32 %v671, %v785
        %v787 = vpop.f32.mrf.mxu0
        %788 = vmatprep.mubr.f32.mxu0 0.0
        %v789 = vand.u32 %v224, 4294901760
        %790 = vmatmul.mubr.f32.gmra.mxu0 %v789
        %v791 = vpop.f32.mrf.mxu0
        %v792 = vadd.f32 %v679, %v791
        %v793 = vpop.f32.mrf.mxu0
        %794 = vdwg.mxu0
        %795 = vmatprep.subr.mxu0 0.0
        %796 = vmatpush1.msra.mxu0 0.0
        %797 = vmatprep.subr.mxu0 0.0
        %798 = vmatpush1.msra.mxu0 0.0
        %799 = vmatprep.subr.mxu0 0.0
        %800 = vmatpush1.msra.mxu0 0.0
        %801 = vmatprep.subr.mxu0 0.0
        %802 = vmatpush1.msra.mxu0 0.0
        %803 = vmatprep.subr.mxu0 0.0
        %804 = vmatpush1.msra.mxu0 0.0
        %805 = vmatprep.subr.mxu0 0.0
        %806 = vmatpush1.msra.mxu0 0.0
        %807 = vmatprep.subr.mxu0 0.0
        %808 = vmatpush1.msra.mxu0 0.0
        %809 = vmatprep.subr.mxu0 0.0
        %810 = vmatpush1.msra.mxu0 0.0
        %811 = vmatprep.subr.mxu0 0.0
        %v812 = vand.u32 %v208, 4294901760
        %813 = vmatpush1.msra.mxu0 %v812
        %814 = vmatprep.subr.mxu0 0.0
        %v815 = vand.u32 %v207, 4294901760
        %816 = vmatpush1.msra.mxu0 %v815
        %817 = vmatprep.subr.mxu0 0.0
        %v818 = vand.u32 %v206, 4294901760
        %819 = vmatpush1.msra.mxu0 %v818
        %820 = vmatprep.subr.mxu0 0.0
        %v821 = vand.u32 %v205, 4294901760
        %822 = vmatpush1.msra.mxu0 %v821
        %823 = vmatprep.subr.mxu0 0.0
        %v824 = vand.u32 %v204, 4294901760
        %825 = vmatpush1.msra.mxu0 %v824
        %826 = vmatprep.subr.mxu0 0.0
        %v827 = vand.u32 %v203, 4294901760
        %828 = vmatpush1.msra.mxu0 %v827
        %829 = vmatprep.subr.mxu0 0.0
        %v830 = vand.u32 %v202, 4294901760
        %831 = vmatpush1.msra.mxu0 %v830
        %832 = vmatprep.subr.mxu0 0.0
        %v833 = vand.u32 %v201, 4294901760
        %834 = vmatpush1.msra.mxu0 %v833
        %835 = vmatprep.subr.mxu0 0.0
        %836 = vmatpush2.msra.mxu0 0.0
        %837 = vmatprep.subr.mxu0 0.0
        %838 = vmatpush2.msra.mxu0 0.0
        %839 = vmatprep.subr.mxu0 0.0
        %840 = vmatpush2.msra.mxu0 0.0
        %841 = vmatprep.subr.mxu0 0.0
        %842 = vmatpush2.msra.mxu0 0.0
        %843 = vmatprep.subr.mxu0 0.0
        %844 = vmatpush2.msra.mxu0 0.0
        %845 = vmatprep.subr.mxu0 0.0
        %846 = vmatpush2.msra.mxu0 0.0
        %847 = vmatprep.subr.mxu0 0.0
        %848 = vmatpush2.msra.mxu0 0.0
        %849 = vmatprep.subr.mxu0 0.0
        %850 = vmatpush2.msra.mxu0 0.0
        %851 = vmatprep.subr.mxu0 0.0
        %852 = vmatpush2.msra.mxu0 0.0
        %853 = vmatprep.subr.mxu0 0.0
        %854 = vmatpush2.msra.mxu0 0.0
        %855 = vmatprep.subr.mxu0 0.0
        %856 = vmatpush2.msra.mxu0 0.0
        %857 = vmatprep.subr.mxu0 0.0
        %858 = vmatpush2.msra.mxu0 0.0
        %859 = vmatprep.subr.mxu0 0.0
        %860 = vmatpush2.msra.mxu0 0.0
        %861 = vmatprep.subr.mxu0 0.0
        %862 = vmatpush2.msra.mxu0 0.0
        %863 = vmatprep.subr.mxu0 0.0
        %864 = vmatpush2.msra.mxu0 0.0
        %865 = vmatprep.subr.mxu0 0.0
        %866 = vmatpush2.msra.mxu0 0.0
        %867 = vmatprep.mubr.f32.mxu0 0.0
        %v868 = vand.u32 %v215, 4294901760
        %869 = vmatmul.mubr.f32.gmra.mxu0 %v868
        %v870 = vpop.f32.mrf.mxu0
        %v871 = vadd.f32 %v774, %v870
        %v872 = vpop.f32.mrf.mxu0
        %873 = vmatprep.mubr.f32.mxu0 0.0
        %v874 = vand.u32 %v218, 4294901760
        %875 = vmatmul.mubr.f32.gmra.mxu0 %v874
        %v876 = vpop.f32.mrf.mxu0
        %v877 = vadd.f32 %v780, %v876
        %v878 = vpop.f32.mrf.mxu0
        %879 = vmatprep.mubr.f32.mxu0 0.0
        %v880 = vand.u32 %v221, 4294901760
        %881 = vmatmul.mubr.f32.gmra.mxu0 %v880
        %v882 = vpop.f32.mrf.mxu0
        %v883 = vadd.f32 %v786, %v882
        %v884 = vpop.f32.mrf.mxu0
        %885 = vmatprep.mubr.f32.mxu0 0.0
        %v886 = vand.u32 %v224, 4294901760
        %887 = vmatmul.mubr.f32.gmra.mxu0 %v886
        %v888 = vpop.f32.mrf.mxu0
        %v889 = vadd.f32 %v792, %v888
        %v890 = vpop.f32.mrf.mxu0
        %891 = vdwg.mxu0
        %892 = vst [vmem:[%s170] sm:$0xff] %v871
        %893 = vst [vmem:[%s170 + $0x8] sm:$0xff] %v877
        %894 = vst [vmem:[%s170 + $0x10] sm:$0xff] %v883
        %895 = vst [vmem:[%s170 + $0x18] sm:$0xff] %v889
        %s896 = sand.u32 %s75, 1
        %s897 = scalar_lea.sflag [#allocation4], %s896
        %s898 = sand.u32 %s75, 1
        %s899 = smul.addr %s898, 32
        %s900 = scalar_lea.vmem [#allocation7], %s899
        // Predicated region
        $region37: #{tpu_custom_call.1} parent=27 // pred_check
          %p901 = pneg %p85
        $region38: #{tpu_custom_call.1} parent=27 // pred_check_branch
          %903 = sbr.rel (%p901) target = $region40
        $region39: #{tpu_custom_call.1} parent=27 // pred_region
          %s905 = ssub.s32 512, 512
          %906 = vsyncadd %s897, %s905
          %s907 = smul.addr %s20, 128
          %s908 = scalar_lea.hbm %s2, %s907
          %s909 = sshll.u32 %s900, 4
          %s910 = int_to_ptr.vmem [resolvable:$true] %s909
          %915 = dma.vmem_to_hbm [thread:$0]  %s910, 512, %s908, %s897, 128, 384, 8
        $region40: #{tpu_custom_call.1} parent=27 // pred_fallthru
          _
      $region28: #{tpu_custom_call.1} parent=5 // pred_fallthru
        _
      %p916 = scmp.le.s32.totalorder 2, %s15
      // Predicated region
      $region41: #{tpu_custom_call.1} parent=5 // pred_check
        %p917 = pneg %p916
      $region42: #{tpu_custom_call.1} parent=5 // pred_check_branch
        %919 = sbr.rel (%p917) target = $region44
      $region43: #{tpu_custom_call.1} parent=5 // pred_region
        %s920 = ssub.s32 %s15, 2
        // Predicated region
        $region45: #{tpu_custom_call.1} parent=43 // pred_check
          %p921 = pneg %p91
        $region46: #{tpu_custom_call.1} parent=43 // pred_check_branch
          %923 = sbr.rel (%p921) target = $region48
        $region47: #{tpu_custom_call.1} parent=43 // pred_region
          %s924 = sand.u32 %s76, 1
          %s925 = scalar_lea.sflag [#allocation4], %s924
          %s926 = sand.u32 %s76, 1
          %s927 = smul.addr %s926, 32
          %s928 = scalar_lea.vmem [#allocation7], %s927
          %929 = dma.done %s925, 512
        $region48: #{tpu_custom_call.1} parent=43 // pred_fallthru
          _
      $region44: #{tpu_custom_call.1} parent=5 // pred_fallthru
        _
    $region6: #{tpu_custom_call.1} parent=1 // loop_footer
      %s19 = sadd.s32 1, %s15
    $region7: #{tpu_custom_call.1} parent=1 // loop_footer_branch
      %14 = sbr.rel target = $region3
    $region8: #{tpu_custom_call.1} parent=1 // loop_exit
      _
    %930 = vsyncpa [#allocation3], 1
    %s931 = scalar_lea.sflag [#allocation3], 1
    %932 = vsyncpa %s931, 1
    %933 = vsyncpa [#allocation6], 1
    %934 = vsyncpa [#allocation4], 1
    %s935 = scalar_lea.sflag [#allocation4], 1
    %936 = vsyncpa %s935, 1

</llo_original>
